<compile_context>
chip_gen: v6e
topology: v6e:2x2x1
jax: 0.10.0
libtpu: 0.0.40
codegen_flags: <defaults>
</compile_context>

<pallas_src>
import functools

import jax
import jax.numpy as jnp
from jax import lax
from jax.experimental import pallas as pl
from jax.experimental.pallas import tpu as pltpu


def _round_up(a, m):
    return (a + m - 1) // m * m


def _sublane_multiple(dtype):
    # f32 -> 8 rows per sublane tile, bf16 -> 16, int8/fp8 -> 32.
    return max(8, 32 // jnp.dtype(dtype).itemsize)


def _pe_kernel(idx_ref, x_ref, tab_ref, gamma_ref, beta_ref, o_ref, *, eps):
    """One row tile: fused two-hot embedding gather + add + LayerNorm."""
    tile = x_ref.shape[0]
    tpad = tab_ref.shape[0]

    # Packed indices: col 0 = ver index, col 1 = Vpad + hor index (offset applied
    # in the wrapper so both hit the single concatenated table).
    idx = idx_ref[...]                                        # (tile, 2) int32

    # Single fused "two-hot" gather on the otherwise-idle MXU. The two hot
    # columns never collide (ver < Vpad <= Vpad + hor), so OR is exact; any
    # index outside the real tables matches nothing and contributes zeros.
    cols = lax.broadcasted_iota(jnp.int32, (tile, tpad), 1)
    twohot = jnp.logical_or(cols == idx[:, 0:1], cols == idx[:, 1:2])
    twohot = twohot.astype(tab_ref.dtype)     # native MXU path when tables are bf16
    pos = jnp.dot(twohot, tab_ref[...], preferred_element_type=jnp.float32)

    # Add + LayerNorm, all in f32, fully vectorized over the tile.
    h = x_ref[...].astype(jnp.float32) + pos
    mean = jnp.mean(h, axis=-1, keepdims=True)
    cent = h - mean
    var = jnp.mean(cent * cent, axis=-1, keepdims=True)
    out = cent * lax.rsqrt(var + eps)
    out = (out * gamma_ref[...].astype(jnp.float32)
           + beta_ref[...].astype(jnp.float32))

    # Dropout in eval mode is the identity.
    o_ref[...] = out.astype(o_ref.dtype)


def learned_encoder_positional_encoding(x, ver_indices, hor_indices,
                                        ver_table, hor_table, gamma, beta,
                                        *, eps=1e-12):
    """x: (B, S, D); ver/hor_indices: (B, S) int; tables: (V, D) / (H, D)."""
    B, S, D = x.shape
    N = B * S
    itemsize = jnp.dtype(x.dtype).itemsize
    sub = _sublane_multiple(x.dtype)

    # ---- tables: pad each to a 128-row multiple, concatenate into one table ----
    v_rows, h_rows = ver_table.shape[0], hor_table.shape[0]
    vpad = _round_up(v_rows, 128)
    hpad = _round_up(h_rows, 128)
    tpad = vpad + hpad
    tab_cat = jnp.concatenate(
        [jnp.pad(ver_table, ((0, vpad - v_rows), (0, 0))),
         jnp.pad(hor_table, ((0, hpad - h_rows), (0, 0)))], axis=0)

    # ---- flatten (NO full-tensor pad; ragged last block handled by the grid) ----
    x2 = x.reshape(N, D)
    idx2 = jnp.stack(
        [ver_indices.reshape(N).astype(jnp.int32),
         hor_indices.reshape(N).astype(jnp.int32) + vpad], axis=-1)   # (N, 2)
    g2 = gamma.reshape(1, D)
    b2 = beta.reshape(1, D)

    # ---- byte-budgeted row-tile selection ----
    lane_d = _round_up(D, 128)                 # lane-padded row width in VMEM
    bytes_per_row = (2 * 2 * lane_d * itemsize   # x in + out, double-buffered
                     + 2 * 128 * 4               # (tile,2) idx block (lane-padded), x2 buf
                     + tpad * 4                  # two-hot temporary (f32 worst case)
                     + 3 * lane_d * 4)           # pos / h / normalized f32 temporaries
    table_bytes = 2 * tpad * lane_d * jnp.dtype(tab_cat.dtype).itemsize
    budget = max(1 << 20, 8 * 1024 * 1024 - table_bytes)   # fits v5e 16 MiB scoped VMEM
    tile = max(sub, (budget // bytes_per_row) // sub * sub)
    tile = min(tile, 8192)
    if N > sub:                                 # prefer >= 2 grid steps (v7x has 2 TCs)
        tile = min(tile, _round_up(pl.cdiv(N, 2), sub))
    tile = max(sub, min(tile, _round_up(N, sub)))
    grid = pl.cdiv(N, tile)

    out = pl.pallas_call(
        functools.partial(_pe_kernel, eps=eps),
        out_shape=jax.ShapeDtypeStruct((N, D), x.dtype),
        grid=(grid,),
        in_specs=[
            pl.BlockSpec((tile, 2), lambda i: (i, 0)),      # packed ver/hor indices
            pl.BlockSpec((tile, D), lambda i: (i, 0)),      # x rows
            pl.BlockSpec((tpad, D), lambda i: (0, 0)),      # concatenated emb table
            pl.BlockSpec((1, D), lambda i: (0, 0)),         # gamma
            pl.BlockSpec((1, D), lambda i: (0, 0)),         # beta
        ],
        out_specs=pl.BlockSpec((tile, D), lambda i: (i, 0)),
        compiler_params=pltpu.CompilerParams(
            dimension_semantics=("parallel",)),             # shard rows across TCs
    )(idx2, x2, tab_cat, g2, b2)

    return out.reshape(B, S, D)


def _reference(x, ver_indices, hor_indices, ver_table, hor_table, gamma, beta,
               eps=1e-12):
    pos = ver_table[ver_indices] + hor_table[hor_indices]
    h = x + pos
    mean = jnp.mean(h, axis=-1, keepdims=True)
    var = jnp.mean((h - mean) ** 2, axis=-1, keepdims=True)
    return (h - mean) / jnp.sqrt(var + eps) * gamma + beta


if __name__ == "__main__":
    # Small shapes consistent with the module's forward.
    B, S, D = 2, 8, 32
    MAX_VER, MAX_HOR = 13, 161
    EPS = 1e-12

    key = jax.random.PRNGKey(0)
    k_x, k_v, k_h, k_vi, k_hi = jax.random.split(key, 5)

    # nn.Embedding ~ N(0,1) with padding_idx=0 row zeroed; nn.LayerNorm: gamma=1, beta=0.
    ver_table = jax.random.normal(k_v, (MAX_VER, D), jnp.float32).at[0].set(0.0)
    hor_table = jax.random.normal(k_h, (MAX_HOR, D), jnp.float32).at[0].set(0.0)
    gamma = jnp.ones((D,), jnp.float32)
    beta = jnp.zeros((D,), jnp.float32)

    x = jax.random.normal(k_x, (B, S, D), jnp.float32)
    ver_indices = jax.random.randint(k_vi, (B, S), 0, MAX_VER, dtype=jnp.int32)
    hor_indices = jax.random.randint(k_hi, (B, S), 0, MAX_HOR, dtype=jnp.int32)

    out = learned_encoder_positional_encoding(
        x, ver_indices, hor_indices, ver_table, hor_table, gamma, beta, eps=EPS)
    out = jax.block_until_ready(out)

    ref = _reference(x, ver_indices, hor_indices, ver_table, hor_table, gamma,
                     beta, EPS)
    assert out.shape == (B, S, D)
    assert jnp.max(jnp.abs(out - ref)) < 1e-4, "mismatch vs reference"

    print("KERNEL_OK")
</pallas_src>

<mosaic_0001>
module attributes {stable_mosaic.version = 11 : i64} {
  func.func @_pe_kernel(%arg0: i32, %arg1: memref<8x2xi32, #tpu.memory_space<vmem>>, %arg2: memref<8x32xf32, #tpu.memory_space<vmem>>, %arg3: memref<384x32xf32, #tpu.memory_space<vmem>>, %arg4: memref<1x32xf32, #tpu.memory_space<vmem>>, %arg5: memref<1x32xf32, #tpu.memory_space<vmem>>, %arg6: memref<8x32xf32, #tpu.memory_space<vmem>>) attributes {dimension_semantics = [#tpu.dimension_semantics<parallel>], iteration_bounds = array<i64: 2>, scalar_prefetch = 0 : i64, scratch_operands = 0 : i64, tpu.core_type = #tpu.core_type<tc>, window_params = [{transform_indices = @transform_0, window_bounds = array<i64: 8, 2>}, {transform_indices = @transform_1, window_bounds = array<i64: 8, 32>}, {pipeline_mode = #tpu.pipeline_mode<synchronous>, transform_indices = @transform_2, window_bounds = array<i64: 384, 32>}, {pipeline_mode = #tpu.pipeline_mode<synchronous>, transform_indices = @transform_3, window_bounds = array<i64: 1, 32>}, {pipeline_mode = #tpu.pipeline_mode<synchronous>, transform_indices = @transform_4, window_bounds = array<i64: 1, 32>}, {transform_indices = @transform_5, window_bounds = array<i64: 8, 32>}]} {
    %c0 = arith.constant 0 : index
    %c0_0 = arith.constant 0 : index
    %0 = vector.load %arg1[%c0, %c0_0] : memref<8x2xi32, #tpu.memory_space<vmem>>, vector<8x2xi32>
    %1 = tpu.iota {dimensions = array<i32: 1>} : vector<8x384xi32>
    %2 = vector.extract_strided_slice %0 {offsets = [0, 0], sizes = [8, 1], strides = [1, 1]} : vector<8x2xi32> to vector<8x1xi32>
    %3 = vector.broadcast %2 : vector<8x1xi32> to vector<8x384xi32>
    %4 = arith.cmpi eq, %1, %3 : vector<8x384xi32>
    %5 = vector.extract_strided_slice %0 {offsets = [0, 1], sizes = [8, 1], strides = [1, 1]} : vector<8x2xi32> to vector<8x1xi32>
    %6 = vector.broadcast %5 : vector<8x1xi32> to vector<8x384xi32>
    %7 = arith.cmpi eq, %1, %6 : vector<8x384xi32>
    %8 = arith.ori %4, %7 : vector<8x384xi1>
    %9 = arith.extui %8 : vector<8x384xi1> to vector<8x384xi32>
    %10 = arith.sitofp %9 : vector<8x384xi32> to vector<8x384xf32>
    %c0_1 = arith.constant 0 : index
    %c0_2 = arith.constant 0 : index
    %11 = vector.load %arg3[%c0_1, %c0_2] : memref<384x32xf32, #tpu.memory_space<vmem>>, vector<384x32xf32>
    %cst = arith.constant dense<0.000000e+00> : vector<8x32xf32>
    %12 = tpu.matmul %10, %11, %cst {dimension_numbers = #tpu.dot_dimension_numbers<[1], [0], [0], [1], [0, 0, 1, 1], [], []>} : vector<8x384xf32>, vector<384x32xf32>, vector<8x32xf32> -> vector<8x32xf32>
    %c0_3 = arith.constant 0 : index
    %c0_4 = arith.constant 0 : index
    %13 = vector.load %arg2[%c0_3, %c0_4] : memref<8x32xf32, #tpu.memory_space<vmem>>, vector<8x32xf32>
    %14 = arith.addf %13, %12 : vector<8x32xf32>
    %cst_5 = arith.constant dense<0.000000e+00> : vector<8xf32>
    %15 = vector.multi_reduction <add>, %14, %cst_5 [1] : vector<8x32xf32> to vector<8xf32>
    %16 = vector.shape_cast %15 : vector<8xf32> to vector<8x1xf32>
    %cst_6 = arith.constant 3.200000e+01 : f32
    %17 = vector.broadcast %cst_6 : f32 to vector<8x1xf32>
    %18 = arith.divf %16, %17 : vector<8x1xf32>
    %19 = vector.broadcast %18 : vector<8x1xf32> to vector<8x32xf32>
    %20 = arith.subf %14, %19 : vector<8x32xf32>
    %21 = arith.mulf %20, %20 : vector<8x32xf32>
    %cst_7 = arith.constant dense<0.000000e+00> : vector<8xf32>
    %22 = vector.multi_reduction <add>, %21, %cst_7 [1] : vector<8x32xf32> to vector<8xf32>
    %23 = vector.shape_cast %22 : vector<8xf32> to vector<8x1xf32>
    %cst_8 = arith.constant 3.200000e+01 : f32
    %24 = vector.broadcast %cst_8 : f32 to vector<8x1xf32>
    %25 = arith.divf %23, %24 : vector<8x1xf32>
    %cst_9 = arith.constant 9.99999996E-13 : f32
    %26 = vector.broadcast %cst_9 : f32 to vector<8x1xf32>
    %27 = arith.addf %25, %26 : vector<8x1xf32>
    %28 = math.rsqrt %27 : vector<8x1xf32>
    %29 = vector.broadcast %28 : vector<8x1xf32> to vector<8x32xf32>
    %30 = arith.mulf %20, %29 : vector<8x32xf32>
    %c0_10 = arith.constant 0 : index
    %c0_11 = arith.constant 0 : index
    %31 = vector.load %arg4[%c0_10, %c0_11] : memref<1x32xf32, #tpu.memory_space<vmem>>, vector<1x32xf32>
    %32 = vector.broadcast %31 : vector<1x32xf32> to vector<8x32xf32>
    %33 = arith.mulf %30, %32 : vector<8x32xf32>
    %c0_12 = arith.constant 0 : index
    %c0_13 = arith.constant 0 : index
    %34 = vector.load %arg5[%c0_12, %c0_13] : memref<1x32xf32, #tpu.memory_space<vmem>>, vector<1x32xf32>
    %35 = vector.broadcast %34 : vector<1x32xf32> to vector<8x32xf32>
    %36 = arith.addf %33, %35 : vector<8x32xf32>
    %c0_14 = arith.constant 0 : index
    %c0_15 = arith.constant 0 : index
    %37 = vector.load %arg6[%c0_14, %c0_15] : memref<8x32xf32, #tpu.memory_space<vmem>>, vector<8x32xf32>
    tpu.vector_store %arg6[%c0_14, %c0_15], %36 {strides = array<i32>} : memref<8x32xf32, #tpu.memory_space<vmem>>, vector<8x32xf32>,
    return
  }
  func.func @transform_0(%arg0: i32) -> (i32, i32) {
    %c0_i32 = arith.constant 0 : i32
    %c0_i32_0 = arith.constant 0 : i32
    return %arg0, %c0_i32 : i32, i32
  }
  func.func @transform_1(%arg0: i32) -> (i32, i32) {
    %c0_i32 = arith.constant 0 : i32
    %c0_i32_0 = arith.constant 0 : i32
    return %arg0, %c0_i32 : i32, i32
  }
  func.func @transform_2(%arg0: i32) -> (i32, i32) {
    %c0_i32 = arith.constant 0 : i32
    %c0_i32_0 = arith.constant 0 : i32
    %c0_i32_1 = arith.constant 0 : i32
    return %c0_i32, %c0_i32_0 : i32, i32
  }
  func.func @transform_3(%arg0: i32) -> (i32, i32) {
    %c0_i32 = arith.constant 0 : i32
    %c0_i32_0 = arith.constant 0 : i32
    %c0_i32_1 = arith.constant 0 : i32
    return %c0_i32, %c0_i32_0 : i32, i32
  }
  func.func @transform_4(%arg0: i32) -> (i32, i32) {
    %c0_i32 = arith.constant 0 : i32
    %c0_i32_0 = arith.constant 0 : i32
    %c0_i32_1 = arith.constant 0 : i32
    return %c0_i32, %c0_i32_0 : i32, i32
  }
  func.func @transform_5(%arg0: i32) -> (i32, i32) {
    %c0_i32 = arith.constant 0 : i32
    %c0_i32_0 = arith.constant 0 : i32
    return %arg0, %c0_i32 : i32, i32
  }
}

</mosaic_0001>

<llo_original>
// kernel: tpu_custom_call.1
$region0: #{tpu_custom_call.1}
  #allocation0 [shape = 'u32[]', space=smem, size = 0x4, offset = 0x4, fixed_abs, tag = 'smem constant byte address 0x4 - core index']
  #allocation1 [shape = 'u32[144,128]{1,0:T(1,128)}', space=vmem, size = 0x12000, scoped, tag = 'internal scratch']
  %s0 = inlined_call_operand.vmem [shape: s32[16,2], index: 0, kind: input, shape index: {}]
  %s1 = inlined_call_operand.vmem [shape: f32[16,32], index: 1, kind: input, shape index: {}]
  %s2 = inlined_call_operand.vmem [shape: f32[384,32], index: 2, kind: input, shape index: {}]
  %s3 = inlined_call_operand.vmem [shape: f32[1,32], index: 3, kind: input, shape index: {}]
  %s4 = inlined_call_operand.vmem [shape: f32[1,32], index: 4, kind: input, shape index: {}]
  %s5 = inlined_call_operand.hbm [shape: f32[16,32], index: 5, kind: output, shape index: {}]
  %s6 = sld [smem:[#allocation0]]
  $region53: #{tpu_custom_call.1} parent=0
    _
  %s8 = ssub.s32 1, %s6
  %s9 = scalar_select 0, %s8, %s6
  $region1: #{tpu_custom_call.1} parent=0
    #allocation2 [shape = 'u8[8192]{0}', space=vmem, size = 0x2000, scoped, tag = 'output window, operand 0']
    #allocation3 [shape = 's32[2]{0}', space=sflag, size = 0x8, scoped, tag = 'scoped memory for tpu_custom_call.1']
    %10 = vsyncpa [#allocation3], 0
    %s11 = scalar_lea.sflag [#allocation3], 1
    %12 = vsyncpa %s11, 0
    loop: start=0, step=1, limit=4
    $region2: #{tpu_custom_call.1} parent=1 // loop_pre_header
      _
    $region3: #{tpu_custom_call.1} parent=1 // loop_header
      %s14 = sphi 0, %s18
      %p15 = scmp.ge.s32.totalorder %s14, 4
      %s24 = sphi 0, %s26
      %s27 = sphi 0, %s24
      %s28 = sphi 0, %s27
      %s44 = sphi 0, %s28
      %s50 = sphi 0, %s52
      %s53 = sphi 0, %s50
      %s54 = sphi 0, %s53
      %s70 = sphi 0, %s54
      %s74 = sphi 0, %s74
      %s76 = sphi 0, %s74
      %s77 = sphi 0, %s76
      %s91 = sphi 0, %s77
      %s95 = sphi 0, %s95
      %s97 = sphi 0, %s95
      %s98 = sphi 0, %s97
      %s112 = sphi 0, %s98
      %s116 = sphi 0, %s116
      %s118 = sphi 0, %s116
      %s119 = sphi 0, %s118
      %s133 = sphi 0, %s119
      %s139 = sphi 0, %s141
      %s142 = sphi 0, %s139
      %s143 = sphi 0, %s142
      %s159 = sphi 0, %s143
    $region4: #{tpu_custom_call.1} parent=1 // loop_header_branch
      %17 = sbr.rel (%p15) target = $region8
    $region5: #{tpu_custom_call.1} parent=1 // loop_body
      %s19 = ssub.s32 %s14, 1
      %s20 = ssub.s32 %s14, 2
      %s21 = sadd.s32 %s14, 1
      %s22 = ssub.s32 %s14, %s21
      %p23 = scmp.eq.s32.totalorder %s22, 0
      %s25 = sadd.s32 %s24, 1
      %s26 = scalar_select %p23, %s24, %s25
      %p29 = pneg %p23
      %p30 = scmp.eq.s32.totalorder %s14, 1
      %p31 = por %p29, %p30
      %p32 = scmp.ne.s32.totalorder %s24, %s27
      %p33 = scmp.eq.s32.totalorder %s14, 0
      %p34 = por %p32, %p33
      %p35 = scmp.ne.s32.totalorder %s24, %s27
      %p36 = scmp.eq.s32.totalorder %s19, 1
      %p37 = por %p35, %p36
      %p38 = scmp.ne.s32.totalorder %s27, %s28
      %p39 = scmp.eq.s32.totalorder %s19, 0
      %p40 = por %p38, %p39
      %p41 = scmp.ne.s32.totalorder %s27, %s28
      %p42 = scmp.eq.s32.totalorder %s20, 1
      %p43 = por %p41, %p42
      %p45 = scmp.ne.s32.totalorder %s28, %s44
      %p46 = scmp.eq.s32.totalorder %s20, 0
      %p47 = por %p45, %p46
      %s48 = ssub.s32 %s14, %s21
      %p49 = scmp.eq.s32.totalorder %s48, 0
      %s51 = sadd.s32 %s50, 1
      %s52 = scalar_select %p49, %s50, %s51
      %p55 = pneg %p49
      %p56 = scmp.eq.s32.totalorder %s14, 1
      %p57 = por %p55, %p56
      %p58 = scmp.ne.s32.totalorder %s50, %s53
      %p59 = scmp.eq.s32.totalorder %s14, 0
      %p60 = por %p58, %p59
      %p61 = scmp.ne.s32.totalorder %s50, %s53
      %p62 = scmp.eq.s32.totalorder %s19, 1
      %p63 = por %p61, %p62
      %p64 = scmp.ne.s32.totalorder %s53, %s54
      %p65 = scmp.eq.s32.totalorder %s19, 0
      %p66 = por %p64, %p65
      %p67 = scmp.ne.s32.totalorder %s53, %s54
      %p68 = scmp.eq.s32.totalorder %s20, 1
      %p69 = por %p67, %p68
      %p71 = scmp.ne.s32.totalorder %s54, %s70
      %p72 = scmp.eq.s32.totalorder %s20, 0
      %p73 = por %p71, %p72
      %s75 = sadd.s32 %s74, 1
      %p78 = scmp.eq.s32.totalorder %s14, 1
      %p79 = scmp.ne.s32.totalorder %s74, %s76
      %p80 = scmp.eq.s32.totalorder %s14, 0
      %p81 = por %p79, %p80
      %p82 = scmp.ne.s32.totalorder %s74, %s76
      %p83 = scmp.eq.s32.totalorder %s19, 1
      %p84 = por %p82, %p83
      %p85 = scmp.ne.s32.totalorder %s76, %s77
      %p86 = scmp.eq.s32.totalorder %s19, 0
      %p87 = por %p85, %p86
      %p88 = scmp.ne.s32.totalorder %s76, %s77
      %p89 = scmp.eq.s32.totalorder %s20, 1
      %p90 = por %p88, %p89
      %p92 = scmp.ne.s32.totalorder %s77, %s91
      %p93 = scmp.eq.s32.totalorder %s20, 0
      %p94 = por %p92, %p93
      %s96 = sadd.s32 %s95, 1
      %p99 = scmp.eq.s32.totalorder %s14, 1
      %p100 = scmp.ne.s32.totalorder %s95, %s97
      %p101 = scmp.eq.s32.totalorder %s14, 0
      %p102 = por %p100, %p101
      %p103 = scmp.ne.s32.totalorder %s95, %s97
      %p104 = scmp.eq.s32.totalorder %s19, 1
      %p105 = por %p103, %p104
      %p106 = scmp.ne.s32.totalorder %s97, %s98
      %p107 = scmp.eq.s32.totalorder %s19, 0
      %p108 = por %p106, %p107
      %p109 = scmp.ne.s32.totalorder %s97, %s98
      %p110 = scmp.eq.s32.totalorder %s20, 1
      %p111 = por %p109, %p110
      %p113 = scmp.ne.s32.totalorder %s98, %s112
      %p114 = scmp.eq.s32.totalorder %s20, 0
      %p115 = por %p113, %p114
      %s117 = sadd.s32 %s116, 1
      %p120 = scmp.eq.s32.totalorder %s14, 1
      %p121 = scmp.ne.s32.totalorder %s116, %s118
      %p122 = scmp.eq.s32.totalorder %s14, 0
      %p123 = por %p121, %p122
      %p124 = scmp.ne.s32.totalorder %s116, %s118
      %p125 = scmp.eq.s32.totalorder %s19, 1
      %p126 = por %p124, %p125
      %p127 = scmp.ne.s32.totalorder %s118, %s119
      %p128 = scmp.eq.s32.totalorder %s19, 0
      %p129 = por %p127, %p128
      %p130 = scmp.ne.s32.totalorder %s118, %s119
      %p131 = scmp.eq.s32.totalorder %s20, 1
      %p132 = por %p130, %p131
      %p134 = scmp.ne.s32.totalorder %s119, %s133
      %p135 = scmp.eq.s32.totalorder %s20, 0
      %p136 = por %p134, %p135
      %s137 = ssub.s32 %s14, %s21
      %p138 = scmp.eq.s32.totalorder %s137, 0
      %s140 = sadd.s32 %s139, 1
      %s141 = scalar_select %p138, %s139, %s140
      %p144 = pneg %p138
      %p145 = scmp.eq.s32.totalorder %s14, 1
      %p146 = por %p144, %p145
      %p147 = scmp.ne.s32.totalorder %s139, %s142
      %p148 = scmp.eq.s32.totalorder %s14, 0
      %p149 = por %p147, %p148
      %p150 = scmp.ne.s32.totalorder %s139, %s142
      %p151 = scmp.eq.s32.totalorder %s19, 1
      %p152 = por %p150, %p151
      %p153 = scmp.ne.s32.totalorder %s142, %s143
      %p154 = scmp.eq.s32.totalorder %s19, 0
      %p155 = por %p153, %p154
      %p156 = scmp.ne.s32.totalorder %s142, %s143
      %p157 = scmp.eq.s32.totalorder %s20, 1
      %p158 = por %p156, %p157
      %p160 = scmp.ne.s32.totalorder %s143, %s159
      %p161 = scmp.eq.s32.totalorder %s20, 0
      %p162 = por %p160, %p161
      %p163 = scmp.le.s32.totalorder 1, %s14
      %p164 = scmp.lt.s32.totalorder %s14, 3
      %p165 = pnand %p163, %p164
      %p166 = pneg %p165
      // Predicated region
      $region9: #{tpu_custom_call.1} parent=5 // pred_check
        _
      $region10: #{tpu_custom_call.1} parent=5 // pred_check_branch
        %168 = sbr.rel (%p165) target = $region12
      $region11: #{tpu_custom_call.1} parent=5 // pred_region
        %s169 = ssub.s32 %s14, 1
        // Predicated region
        $region13: #{tpu_custom_call.1} parent=11 // pred_check
          %p170 = pneg %p87
        $region14: #{tpu_custom_call.1} parent=11 // pred_check_branch
          %172 = sbr.rel (%p170) target = $region16
        $region15: #{tpu_custom_call.1} parent=11 // pred_region
          _
        $region16: #{tpu_custom_call.1} parent=11 // pred_fallthru
          _
        // Predicated region
        $region17: #{tpu_custom_call.1} parent=11 // pred_check
          %p173 = pneg %p108
        $region18: #{tpu_custom_call.1} parent=11 // pred_check_branch
          %175 = sbr.rel (%p173) target = $region20
        $region19: #{tpu_custom_call.1} parent=11 // pred_region
          _
        $region20: #{tpu_custom_call.1} parent=11 // pred_fallthru
          _
        // Predicated region
        $region21: #{tpu_custom_call.1} parent=11 // pred_check
          %p176 = pneg %p129
        $region22: #{tpu_custom_call.1} parent=11 // pred_check_branch
          %178 = sbr.rel (%p176) target = $region24
        $region23: #{tpu_custom_call.1} parent=11 // pred_region
          _
        $region24: #{tpu_custom_call.1} parent=11 // pred_fallthru
          _
      $region12: #{tpu_custom_call.1} parent=5 // pred_fallthru
        _
      %p179 = scmp.lt.s32.totalorder %s14, 2
      // Predicated region
      $region25: #{tpu_custom_call.1} parent=5 // pred_check
        %p180 = pneg %p179
      $region26: #{tpu_custom_call.1} parent=5 // pred_check_branch
        %182 = sbr.rel (%p180) target = $region28
      $region27: #{tpu_custom_call.1} parent=5 // pred_region
        // Predicated region
        $region29: #{tpu_custom_call.1} parent=27 // pred_check
          %p183 = pneg %p34
        $region30: #{tpu_custom_call.1} parent=27 // pred_check_branch
          %185 = sbr.rel (%p183) target = $region32
        $region31: #{tpu_custom_call.1} parent=27 // pred_region
          %p186 = scmp.lt.s32.totalorder %s14, 1
          %s187 = scalar_select %p186, %s14, 1
          %s188 = smul.addr %s187, 8
          %s189 = scalar_lea.vmem %s0, %s188
        $region32: #{tpu_custom_call.1} parent=27 // pred_fallthru
          _
        // Predicated region
        $region33: #{tpu_custom_call.1} parent=27 // pred_check
          %p190 = pneg %p60
        $region34: #{tpu_custom_call.1} parent=27 // pred_check_branch
          %192 = sbr.rel (%p190) target = $region36
        $region35: #{tpu_custom_call.1} parent=27 // pred_region
          %p193 = scmp.lt.s32.totalorder %s14, 1
          %s194 = scalar_select %p193, %s14, 1
          %s195 = smul.addr %s194, 8
          %s196 = scalar_lea.vmem %s1, %s195
        $region36: #{tpu_custom_call.1} parent=27 // pred_fallthru
          _
      $region28: #{tpu_custom_call.1} parent=5 // pred_fallthru
        _
      %p197 = scmp.le.s32.totalorder 1, %s14
      %p198 = scmp.lt.s32.totalorder %s14, 3
      %p199 = pnand %p197, %p198
      %p200 = pneg %p199
      // Predicated region
      $region37: #{tpu_custom_call.1} parent=5 // pred_check
        _
      $region38: #{tpu_custom_call.1} parent=5 // pred_check_branch
        %202 = sbr.rel (%p199) target = $region40
      $region39: #{tpu_custom_call.1} parent=5 // pred_region
        %s203 = ssub.s32 %s14, 1
        %p204 = scmp.lt.s32.totalorder %s19, 1
        %s205 = scalar_select %p204, %s19, 1
        %s206 = smul.addr %s205, 8
        %s207 = scalar_lea.vmem %s0, %s206
        %p208 = pneg %p40
        %p209 = pneg %p37
        %p210 = scmp.lt.s32.totalorder %s19, 1
        %s211 = scalar_select %p210, %s19, 1
        %s212 = smul.addr %s211, 8
        %s213 = scalar_lea.vmem %s1, %s212
        %p214 = pneg %p66
        %p215 = pneg %p63
        %p216 = pneg %p87
        %p217 = pneg %p84
        %p218 = pneg %p108
        %p219 = pneg %p105
        %p220 = pneg %p129
        %p221 = pneg %p126
        %p222 = pneg %p155
        %p223 = pneg %p152
        %s224 = sand.u32 %s142, 1
        %s225 = scalar_lea.sflag [#allocation3], %s224
        %s226 = sand.u32 %s142, 1
        %s227 = smul.addr %s226, 8
        %s228 = scalar_lea.vmem [#allocation2], %s227
        %p229 = scmp.lt.s32.totalorder %s19, 1
        %s230 = scalar_select %p229, %s19, 1
        %s231 = smul.addr %s230, 8
        %s232 = scalar_lea.vmem %s0, %s231
        %p233 = scmp.lt.s32.totalorder %s19, 1
        %s234 = scalar_select %p233, %s19, 1
        %s235 = smul.addr %s234, 8
        %s236 = scalar_lea.vmem %s1, %s235
        %v237 = vld [vmem:[%s232] sm:$0xff]
        %v238 = vlaneseq
        %v239 = vand.u32 %v238, 127
        %v240 = vadd.s32 %v239, 128
        %v241 = vadd.s32 %v239, 256
        %242 = vset.pattern.permute.xlu0 0
        %243 = vperm.xlu0 %242, %v237
        %v244 = vpop.permute.xlu0 %243
        %vm245 = vcmp.eq.s32.totalorder %v239, %v244
        %vm246 = vcmp.eq.s32.totalorder %v240, %v244
        %vm247 = vcmp.eq.s32.totalorder %v241, %v244
        %248 = vset.pattern.permute.xlu0 1
        %249 = vperm.xlu0 %248, %v237
        %v250 = vpop.permute.xlu0 %249
        %vm251 = vcmp.eq.s32.totalorder %v239, %v250
        %vm252 = vcmp.eq.s32.totalorder %v240, %v250
        %vm253 = vcmp.eq.s32.totalorder %v241, %v250
        %vm254 = vmor %vm245, %vm251
        %vm255 = vmor %vm246, %vm252
        %vm256 = vmor %vm247, %vm253
        %v257 = vsel %vm254, 1, 0
        %v258 = vsel %vm255, 1, 0
        %v259 = vsel %vm256, 1, 0
        %v260 = vcvt.s32.f32 %v257
        %v261 = vcvt.s32.f32 %v258
        %v262 = vcvt.s32.f32 %v259
        %v263 = vld [vmem:[%s2] sm:$0xff]
        %v264 = vld [vmem:[%s2 + $0x8] sm:$0xff]
        %v265 = vld [vmem:[%s2 + $0x10] sm:$0xff]
        %v266 = vld [vmem:[%s2 + $0x18] sm:$0xff]
        %v267 = vld [vmem:[%s2 + $0x20] sm:$0xff]
        %v268 = vld [vmem:[%s2 + $0x28] sm:$0xff]
        %v269 = vld [vmem:[%s2 + $0x30] sm:$0xff]
        %v270 = vld [vmem:[%s2 + $0x38] sm:$0xff]
        %v271 = vld [vmem:[%s2 + $0x40] sm:$0xff]
        %v272 = vld [vmem:[%s2 + $0x48] sm:$0xff]
        %v273 = vld [vmem:[%s2 + $0x50] sm:$0xff]
        %v274 = vld [vmem:[%s2 + $0x58] sm:$0xff]
        %v275 = vld [vmem:[%s2 + $0x60] sm:$0xff]
        %v276 = vld [vmem:[%s2 + $0x68] sm:$0xff]
        %v277 = vld [vmem:[%s2 + $0x70] sm:$0xff]
        %v278 = vld [vmem:[%s2 + $0x78] sm:$0xff]
        %v279 = vld [vmem:[%s2 + $0x80] sm:$0xff]
        %v280 = vld [vmem:[%s2 + $0x88] sm:$0xff]
        %v281 = vld [vmem:[%s2 + $0x90] sm:$0xff]
        %v282 = vld [vmem:[%s2 + $0x98] sm:$0xff]
        %v283 = vld [vmem:[%s2 + $0xa0] sm:$0xff]
        %v284 = vld [vmem:[%s2 + $0xa8] sm:$0xff]
        %v285 = vld [vmem:[%s2 + $0xb0] sm:$0xff]
        %v286 = vld [vmem:[%s2 + $0xb8] sm:$0xff]
        %v287 = vld [vmem:[%s2 + $0xc0] sm:$0xff]
        %v288 = vld [vmem:[%s2 + $0xc8] sm:$0xff]
        %v289 = vld [vmem:[%s2 + $0xd0] sm:$0xff]
        %v290 = vld [vmem:[%s2 + $0xd8] sm:$0xff]
        %v291 = vld [vmem:[%s2 + $0xe0] sm:$0xff]
        %v292 = vld [vmem:[%s2 + $0xe8] sm:$0xff]
        %v293 = vld [vmem:[%s2 + $0xf0] sm:$0xff]
        %v294 = vld [vmem:[%s2 + $0xf8] sm:$0xff]
        %v295 = vld [vmem:[%s2 + $0x100] sm:$0xff]
        %v296 = vld [vmem:[%s2 + $0x108] sm:$0xff]
        %v297 = vld [vmem:[%s2 + $0x110] sm:$0xff]
        %v298 = vld [vmem:[%s2 + $0x118] sm:$0xff]
        %v299 = vld [vmem:[%s2 + $0x120] sm:$0xff]
        %v300 = vld [vmem:[%s2 + $0x128] sm:$0xff]
        %v301 = vld [vmem:[%s2 + $0x130] sm:$0xff]
        %v302 = vld [vmem:[%s2 + $0x138] sm:$0xff]
        %v303 = vld [vmem:[%s2 + $0x140] sm:$0xff]
        %v304 = vld [vmem:[%s2 + $0x148] sm:$0xff]
        %v305 = vld [vmem:[%s2 + $0x150] sm:$0xff]
        %v306 = vld [vmem:[%s2 + $0x158] sm:$0xff]
        %v307 = vld [vmem:[%s2 + $0x160] sm:$0xff]
        %v308 = vld [vmem:[%s2 + $0x168] sm:$0xff]
        %v309 = vld [vmem:[%s2 + $0x170] sm:$0xff]
        %v310 = vld [vmem:[%s2 + $0x178] sm:$0xff]
        %311 = vmatprep.subr.mxu0 0.0
        %312 = vmatpush1.msra.mxu0 %v278
        %313 = vmatprep.subr.mxu0 0.0
        %314 = vmatpush1.msra.mxu0 %v277
        %315 = vmatprep.subr.mxu0 0.0
        %316 = vmatpush1.msra.mxu0 %v276
        %317 = vmatprep.subr.mxu0 0.0
        %318 = vmatpush1.msra.mxu0 %v275
        %319 = vmatprep.subr.mxu0 0.0
        %320 = vmatpush1.msra.mxu0 %v274
        %321 = vmatprep.subr.mxu0 0.0
        %322 = vmatpush1.msra.mxu0 %v273
        %323 = vmatprep.subr.mxu0 0.0
        %324 = vmatpush1.msra.mxu0 %v272
        %325 = vmatprep.subr.mxu0 0.0
        %326 = vmatpush1.msra.mxu0 %v271
        %327 = vmatprep.subr.mxu0 0.0
        %328 = vmatpush1.msra.mxu0 %v270
        %329 = vmatprep.subr.mxu0 0.0
        %330 = vmatpush1.msra.mxu0 %v269
        %331 = vmatprep.subr.mxu0 0.0
        %332 = vmatpush1.msra.mxu0 %v268
        %333 = vmatprep.subr.mxu0 0.0
        %334 = vmatpush1.msra.mxu0 %v267
        %335 = vmatprep.subr.mxu0 0.0
        %336 = vmatpush1.msra.mxu0 %v266
        %337 = vmatprep.subr.mxu0 0.0
        %338 = vmatpush1.msra.mxu0 %v265
        %339 = vmatprep.subr.mxu0 0.0
        %340 = vmatpush1.msra.mxu0 %v264
        %341 = vmatprep.subr.mxu0 0.0
        %342 = vmatpush1.msra.mxu0 %v263
        %343 = vmatprep.subr.mxu0 0.0
        %344 = vmatpush2.msra.mxu0 %v294
        %345 = vmatprep.subr.mxu0 0.0
        %346 = vmatpush2.msra.mxu0 %v293
        %347 = vmatprep.subr.mxu0 0.0
        %348 = vmatpush2.msra.mxu0 %v292
        %349 = vmatprep.subr.mxu0 0.0
        %350 = vmatpush2.msra.mxu0 %v291
        %351 = vmatprep.subr.mxu0 0.0
        %352 = vmatpush2.msra.mxu0 %v290
        %353 = vmatprep.subr.mxu0 0.0
        %354 = vmatpush2.msra.mxu0 %v289
        %355 = vmatprep.subr.mxu0 0.0
        %356 = vmatpush2.msra.mxu0 %v288
        %357 = vmatprep.subr.mxu0 0.0
        %358 = vmatpush2.msra.mxu0 %v287
        %359 = vmatprep.subr.mxu0 0.0
        %360 = vmatpush2.msra.mxu0 %v286
        %361 = vmatprep.subr.mxu0 0.0
        %362 = vmatpush2.msra.mxu0 %v285
        %363 = vmatprep.subr.mxu0 0.0
        %364 = vmatpush2.msra.mxu0 %v284
        %365 = vmatprep.subr.mxu0 0.0
        %366 = vmatpush2.msra.mxu0 %v283
        %367 = vmatprep.subr.mxu0 0.0
        %368 = vmatpush2.msra.mxu0 %v282
        %369 = vmatprep.subr.mxu0 0.0
        %370 = vmatpush2.msra.mxu0 %v281
        %371 = vmatprep.subr.mxu0 0.0
        %372 = vmatpush2.msra.mxu0 %v280
        %373 = vmatprep.subr.mxu0 0.0
        %374 = vmatpush2.msra.mxu0 %v279
        %375 = vmatprep.mubr.f32.mxu0 %v261
        %376 = vmatmul.mubr.f32.gmra.mxu0 %v260
        %v377 = vpop.f32.mrf.mxu0
        %v378 = vadd.f32 0.0, %v377
        %v379 = vpop.f32.mrf.mxu0
        %380 = vdwg.mxu0
        %381 = vmatprep.subr.mxu0 0.0
        %382 = vmatpush1.msra.mxu0 %v310
        %383 = vmatprep.subr.mxu0 0.0
        %384 = vmatpush1.msra.mxu0 %v309
        %385 = vmatprep.subr.mxu0 0.0
        %386 = vmatpush1.msra.mxu0 %v308
        %387 = vmatprep.subr.mxu0 0.0
        %388 = vmatpush1.msra.mxu0 %v307
        %389 = vmatprep.subr.mxu0 0.0
        %390 = vmatpush1.msra.mxu0 %v306
        %391 = vmatprep.subr.mxu0 0.0
        %392 = vmatpush1.msra.mxu0 %v305
        %393 = vmatprep.subr.mxu0 0.0
        %394 = vmatpush1.msra.mxu0 %v304
        %395 = vmatprep.subr.mxu0 0.0
        %396 = vmatpush1.msra.mxu0 %v303
        %397 = vmatprep.subr.mxu0 0.0
        %398 = vmatpush1.msra.mxu0 %v302
        %399 = vmatprep.subr.mxu0 0.0
        %400 = vmatpush1.msra.mxu0 %v301
        %401 = vmatprep.subr.mxu0 0.0
        %402 = vmatpush1.msra.mxu0 %v300
        %403 = vmatprep.subr.mxu0 0.0
        %404 = vmatpush1.msra.mxu0 %v299
        %405 = vmatprep.subr.mxu0 0.0
        %406 = vmatpush1.msra.mxu0 %v298
        %407 = vmatprep.subr.mxu0 0.0
        %408 = vmatpush1.msra.mxu0 %v297
        %409 = vmatprep.subr.mxu0 0.0
        %410 = vmatpush1.msra.mxu0 %v296
        %411 = vmatprep.subr.mxu0 0.0
        %412 = vmatpush1.msra.mxu0 %v295
        %413 = vmatprep.subr.mxu0 0.0
        %414 = vmatpush2.msra.mxu0 0.0
        %415 = vmatprep.subr.mxu0 0.0
        %416 = vmatpush2.msra.mxu0 0.0
        %417 = vmatprep.subr.mxu0 0.0
        %418 = vmatpush2.msra.mxu0 0.0
        %419 = vmatprep.subr.mxu0 0.0
        %420 = vmatpush2.msra.mxu0 0.0
        %421 = vmatprep.subr.mxu0 0.0
        %422 = vmatpush2.msra.mxu0 0.0
        %423 = vmatprep.subr.mxu0 0.0
        %424 = vmatpush2.msra.mxu0 0.0
        %425 = vmatprep.subr.mxu0 0.0
        %426 = vmatpush2.msra.mxu0 0.0
        %427 = vmatprep.subr.mxu0 0.0
        %428 = vmatpush2.msra.mxu0 0.0
        %429 = vmatprep.subr.mxu0 0.0
        %430 = vmatpush2.msra.mxu0 0.0
        %431 = vmatprep.subr.mxu0 0.0
        %432 = vmatpush2.msra.mxu0 0.0
        %433 = vmatprep.subr.mxu0 0.0
        %434 = vmatpush2.msra.mxu0 0.0
        %435 = vmatprep.subr.mxu0 0.0
        %436 = vmatpush2.msra.mxu0 0.0
        %437 = vmatprep.subr.mxu0 0.0
        %438 = vmatpush2.msra.mxu0 0.0
        %439 = vmatprep.subr.mxu0 0.0
        %440 = vmatpush2.msra.mxu0 0.0
        %441 = vmatprep.subr.mxu0 0.0
        %442 = vmatpush2.msra.mxu0 0.0
        %443 = vmatprep.subr.mxu0 0.0
        %444 = vmatpush2.msra.mxu0 0.0
        %445 = vmatprep.mubr.f32.mxu0 0.0
        %446 = vmatmul.mubr.f32.gmra.mxu0 %v262
        %v447 = vpop.f32.mrf.mxu0
        %v448 = vadd.f32 %v378, %v447
        %v449 = vpop.f32.mrf.mxu0
        %450 = vdwg.mxu0
        %v451 = vld [vmem:[%s236] sm:$0xff]
        %v452 = vadd.f32 %v451, %v448
        %vm453 = vcmask 261120
        %v454 = vsel %vm453, %v452, 0.0
        %455 = vadd.xlane.f32.xlu0 %v454
        %v456 = vpop.xlane.xlu0 %455
        %v457 = vrcp.pop 32.0
        %v458 = vmul.f32 %v456, %v457
        %v459 = vsub.f32 %v452, %v458
        %v460 = vmul.f32 %v459, %v459
        %v461 = vsel %vm453, %v460, 0.0
        %462 = vadd.xlane.f32.xlu0 %v461
        %v463 = vpop.xlane.xlu0 %462
        %v464 = vmul.f32 %v463, %v457
        %v465 = vadd.f32 %v464, 1e-12
        %v466 = vrsqrt.pop %v465
        %v467 = vmul.f32 %v459, %v466
        %v468 = vld [vmem:[%s3] sm:$0x1]
        %v470 = vlaneseq
        %v471 = vshrl.u32 %v470, 7
        %v472 = vsub.s32 0, %v471
        %v473 = vrot.slane %v468, %v472
        %v475 = vmul.f32 %v467, %v473
        %v476 = vld [vmem:[%s4] sm:$0x1]
        %v478 = vlaneseq
        %v479 = vshrl.u32 %v478, 7
        %v480 = vsub.s32 0, %v479
        %v481 = vrot.slane %v476, %v480
        %v483 = vadd.f32 %v475, %v481
        %484 = vst.msk [vmem:[%s228] sm:$0xff] %vm453, %v483
        %s485 = sand.u32 %s142, 1
        %s486 = scalar_lea.sflag [#allocation3], %s485
        %s487 = sand.u32 %s142, 1
        %s488 = smul.addr %s487, 8
        %s489 = scalar_lea.vmem [#allocation2], %s488
        // Predicated region
        $region41: #{tpu_custom_call.1} parent=39 // pred_check
          %p490 = pneg %p152
        $region42: #{tpu_custom_call.1} parent=39 // pred_check_branch
          %492 = sbr.rel (%p490) target = $region44
        $region43: #{tpu_custom_call.1} parent=39 // pred_region
          %s494 = ssub.s32 128, 128
          %495 = vsyncadd %s486, %s494
          %s496 = smul.addr %s19, 128
          %s497 = scalar_lea.hbm %s5, %s496
          %s499 = sshll.u32 %s489, 4
          %s500 = int_to_ptr.vmem [resolvable:$true] %s499
          %502 = dma.vmem_to_hbm [thread:$0]  %s500, 128, %s497, %s486
        $region44: #{tpu_custom_call.1} parent=39 // pred_fallthru
          _
      $region40: #{tpu_custom_call.1} parent=5 // pred_fallthru
        _
      %p503 = scmp.le.s32.totalorder 2, %s14
      // Predicated region
      $region45: #{tpu_custom_call.1} parent=5 // pred_check
        %p504 = pneg %p503
      $region46: #{tpu_custom_call.1} parent=5 // pred_check_branch
        %506 = sbr.rel (%p504) target = $region48
      $region47: #{tpu_custom_call.1} parent=5 // pred_region
        %s507 = ssub.s32 %s14, 2
        // Predicated region
        $region49: #{tpu_custom_call.1} parent=47 // pred_check
          %p508 = pneg %p158
        $region50: #{tpu_custom_call.1} parent=47 // pred_check_branch
          %510 = sbr.rel (%p508) target = $region52
        $region51: #{tpu_custom_call.1} parent=47 // pred_region
          %s511 = sand.u32 %s143, 1
          %s512 = scalar_lea.sflag [#allocation3], %s511
          %s513 = sand.u32 %s143, 1
          %s514 = smul.addr %s513, 8
          %s515 = scalar_lea.vmem [#allocation2], %s514
          %516 = dma.done %s512, 128
        $region52: #{tpu_custom_call.1} parent=47 // pred_fallthru
          _
      $region48: #{tpu_custom_call.1} parent=5 // pred_fallthru
        _
    $region6: #{tpu_custom_call.1} parent=1 // loop_footer
      %s18 = sadd.s32 1, %s14
    $region7: #{tpu_custom_call.1} parent=1 // loop_footer_branch
      %13 = sbr.rel target = $region3
    $region8: #{tpu_custom_call.1} parent=1 // loop_exit
      _
    %517 = vsyncpa [#allocation3], 1
    %s518 = scalar_lea.sflag [#allocation3], 1
    %519 = vsyncpa %s518, 1

</llo_original>
